<compile_context>
chip_gen: v5e
topology: v5e:2x2
jax: 0.10.0
libtpu: 0.0.40
codegen_flags: <defaults>
</compile_context>

<pallas_src>
import functools

import jax
import jax.numpy as jnp
from jax.experimental import pallas as pl
from jax.experimental.pallas import tpu as pltpu


def _cdiv(a, b):
    return -(-a // b)


def _round_up(a, m):
    return _cdiv(a, m) * m


def _conv_patch_kernel(x_ref, h_ref, w_ref, b_ref, o_ref, win_ref, patch_ref,
                       *, taps, tile_n, c_in):
    """One (batch, lane-tile) grid step.

    x_ref    : (1, C, tN)       main activation tile (flattened (F,T) lanes)
    h_ref    : (1, C, Hp)       halo: first Hp lanes of the *next* tile
    w_ref    : (O, K)           fused conv weights, K = kF*kT*C (tap-major)
    b_ref    : (O, 1)           bias (f32)
    o_ref    : (1, O, tN)       lane-dense output tile
    win_ref  : (C, tN + Hp)     VMEM scratch: contiguous window = [main | halo]
    patch_ref: (K, tN)          VMEM scratch: in-VMEM im2col patch
    """
    tn = tile_n
    # Stitch the contiguous lane window (main tile + right halo) in VMEM.
    win_ref[:, :tn] = x_ref[0]
    win_ref[:, tn:] = h_ref[0]
    # In-VMEM im2col: each conv tap is a lane-shifted view of the window.
    # Tap-major rows keep every write a contiguous C-row block.
    for i, d in enumerate(taps):
        patch_ref[i * c_in:(i + 1) * c_in, :] = win_ref[:, d:d + tn]
    # Single fused MXU contraction over K = C*kF*kT, f32 accumulation.
    acc = jnp.dot(w_ref[...], patch_ref[...], preferred_element_type=jnp.float32)
    o_ref[0] = (acc + b_ref[...]).astype(o_ref.dtype)


def causal_conv(x, w, b, *, stride=(1, 1), compute_dtype=None, out_dtype=None,
                tile_n=4096, vmem_budget_bytes=24 * 1024 * 1024,
                min_grid_steps=4):
    """Conv2d with "same" frequency padding and causal time padding.

    x: (B, C, F, T); w: (O, C, kF, kT) (PyTorch OIHW); b: (O,)
    returns (B, O, F_out, min(T_conv, T)).

    compute_dtype: e.g. jnp.bfloat16 (recommended default on v5e; beneficial on
    v6e/v7x) — MXU accumulation stays f32.  out_dtype defaults to x.dtype.
    """
    B, C, F, T = x.shape
    O, Cw, kF, kT = w.shape
    assert Cw == C, (Cw, C)
    sF, sT = stride
    pF = kF // 2          # "same" for odd kF (as in the PyTorch module)
    pT = kT - 1           # symmetric time pad; output sliced to [:T] => causal

    F_out = (F + 2 * pF - kF) // sF + 1
    T_full = (T + 2 * pT - kT) // sT + 1
    T_out = min(T_full, T)
    K = kF * kT * C

    cdt = jnp.dtype(compute_dtype) if compute_dtype is not None else jnp.dtype(x.dtype)
    odt = jnp.dtype(out_dtype) if out_dtype is not None else jnp.dtype(x.dtype)

    # Flattened-lane layout: lane index of x_pad[c, f, t] is f*row_pitch + t,
    # so each conv tap (kf, kt) is a pure lane shift d = kf*row_pitch + kt and
    # output (f, t) lives at lane f*sF*row_pitch + t*sT.
    row_pitch = T + 2 * pT
    d_max = (kF - 1) * row_pitch + (kT - 1)
    halo = max(128, _round_up(max(d_max, 1), 128))      # halo tile width (lanes)
    lanes_needed = F_out * sF * row_pitch               # lanes we must compute
    taps = tuple(kf * row_pitch + kt for kf in range(kF) for kt in range(kT))

    # ---- tile sizing from the actual VMEM footprint (review items 2/3/9) ----
    in_b, out_b = cdt.itemsize, odt.itemsize

    def _pad8(r):
        return _round_up(r, 8)

    def _vmem_est(tn):
        blocks = 2 * _pad8(C) * (tn + halo) * in_b       # x main + halo, double-buffered
        blocks += 2 * _pad8(O) * tn * out_b              # output, double-buffered
        scratch = _pad8(C) * (tn + halo) * in_b + _pad8(K) * tn * in_b
        weights = 2 * (_pad8(O) * max(K, 128) * in_b + _pad8(O) * 128 * 4)
        return blocks + scratch + weights

    tile_n = max(int(tile_n), 128)
    tN = min(tile_n, _round_up(lanes_needed, halo))
    tN = max(halo, (tN // halo) * halo)                  # must be a multiple of halo
    while _vmem_est(tN) > vmem_budget_bytes and tN > halo:
        tN -= halo
    # Enough grid steps for the pipeline to overlap DMA with compute.
    while B * _cdiv(lanes_needed, tN) < min_grid_steps and tN > halo:
        tN = max(halo, ((tN // 2) // halo) * halo)

    grid_n = _cdiv(lanes_needed, tN)
    N = grid_n * tN
    ratio = tN // halo

    # vmem limit from the real requirement + headroom (not a blanket 48 MiB).
    vmem_limit = max(16 * 1024 * 1024, int(_vmem_est(tN) * 1.5) + (4 << 20))

    # ---- single pad of x (freq "same" pad + causal time pad + alignment rows) ----
    x = x.astype(cdt)
    F_tot = _cdiv(N + halo, row_pitch)                   # >= F + 2*pF by construction
    pad_f_right = F_tot - F - pF
    x_pad = jnp.pad(x, ((0, 0), (0, 0), (pF, pad_f_right), (pT, pT)))
    x_flat = x_pad.reshape(B, C, F_tot * row_pitch)      # free reshape, no copy

    # Fused weights, tap-major K = (kf, kt, c) to match the in-kernel patch build.
    w_k = jnp.transpose(w, (0, 2, 3, 1)).reshape(O, K).astype(cdt)
    bias_col = b.reshape(O, 1).astype(jnp.float32)

    kernel = functools.partial(_conv_patch_kernel, taps=taps, tile_n=tN, c_in=C)

    def _run(weight_pipeline_mode):
        wkw = {}
        if weight_pipeline_mode is not None:
            wkw["pipeline_mode"] = weight_pipeline_mode
        return pl.pallas_call(
            kernel,
            out_shape=jax.ShapeDtypeStruct((B, O, N), odt),
            grid=(B, grid_n),
            in_specs=[
                pl.BlockSpec((1, C, tN), lambda bi, ni: (bi, 0, ni)),
                pl.BlockSpec((1, C, halo), lambda bi, ni: (bi, 0, (ni + 1) * ratio)),
                pl.BlockSpec((O, K), lambda bi, ni: (0, 0), **wkw),
                pl.BlockSpec((O, 1), lambda bi, ni: (0, 0), **wkw),
            ],
            out_specs=pl.BlockSpec((1, O, tN), lambda bi, ni: (bi, 0, ni)),
            scratch_shapes=[
                pltpu.VMEM((C, tN + halo), cdt),   # window = [main | halo]
                pltpu.VMEM((K, tN), cdt),          # in-VMEM im2col patch
            ],
            compiler_params=pltpu.CompilerParams(
                dimension_semantics=("parallel", "parallel"),
                vmem_limit_bytes=vmem_limit),
        )(x_flat, x_flat, w_k, bias_col)

    try:
        # Single-buffer the grid-invariant weights/bias (review item 4).
        out_flat = _run(pl.Buffered(1) if hasattr(pl, "Buffered") else None)
    except Exception:
        out_flat = _run(None)   # older Pallas: default (double-buffered) weights

    # Extraction (wrapper-side XLA glue): lane f*sF*row_pitch + t*sT -> (f, t).
    out4 = out_flat[:, :, :lanes_needed].reshape(B, O, F_out, sF * row_pitch)
    out4 = out4[:, :, :, 0:(T_out - 1) * sT + 1:sT]
    return out4


if __name__ == "__main__":
    key = jax.random.PRNGKey(0)
    kx, kw, kb, kx2, kw2, kb2 = jax.random.split(key, 6)

    def _ref_conv(x, w, b, stride):
        kF, kT = w.shape[2], w.shape[3]
        pF, pT = kF // 2, kT - 1
        T = x.shape[-1]
        r = jax.lax.conv_general_dilated(
            x, w, window_strides=stride, padding=((pF, pF), (pT, pT)),
            dimension_numbers=("NCHW", "OIHW", "NCHW"),
            precision=jax.lax.Precision.HIGHEST)
        return (r + b.reshape(1, -1, 1, 1))[..., :T]

    # --- test 1: 3x3, stride (1,1), f32 (exact-ish) ---
    x = jax.random.normal(kx, (2, 4, 16, 16), dtype=jnp.float32)
    w = 0.1 * jax.random.normal(kw, (8, 4, 3, 3), dtype=jnp.float32)
    b = 0.1 * jax.random.normal(kb, (8,), dtype=jnp.float32)
    out = jax.block_until_ready(causal_conv(x, w, b, stride=(1, 1)))
    ref = _ref_conv(x, w, b, (1, 1))
    assert out.shape == ref.shape, (out.shape, ref.shape)
    assert jnp.allclose(out, ref, atol=1e-4, rtol=1e-4), float(
        jnp.max(jnp.abs(out - ref)))

    # --- test 2: (1,3), stride (1,2) (the strided encoder conv), f32 ---
    x2 = jax.random.normal(kx2, (2, 8, 16, 16), dtype=jnp.float32)
    w2 = 0.1 * jax.random.normal(kw2, (8, 8, 1, 3), dtype=jnp.float32)
    b2 = 0.1 * jax.random.normal(kb2, (8,), dtype=jnp.float32)
    out2 = jax.block_until_ready(causal_conv(x2, w2, b2, stride=(1, 2)))
    ref2 = _ref_conv(x2, w2, b2, (1, 2))
    assert out2.shape == ref2.shape, (out2.shape, ref2.shape)
    assert jnp.allclose(out2, ref2, atol=1e-4, rtol=1e-4), float(
        jnp.max(jnp.abs(out2 - ref2)))

    # --- test 3: bf16 compute path (f32 accumulation), loose tolerance ---
    out3 = jax.block_until_ready(
        causal_conv(x, w, b, stride=(1, 1), compute_dtype=jnp.bfloat16))
    assert jnp.allclose(out3, ref, atol=5e-2, rtol=5e-2), float(
        jnp.max(jnp.abs(out3 - ref)))

    print("KERNEL_OK")
</pallas_src>

<mosaic_0001>
module attributes {stable_mosaic.version = 11 : i64} {
  func.func @_conv_patch_kernel(%arg0: i32, %arg1: i32, %arg2: memref<1x4x128xf32, #tpu.memory_space<vmem>>, %arg3: memref<1x4x128xf32, #tpu.memory_space<vmem>>, %arg4: memref<8x36xf32, #tpu.memory_space<vmem>>, %arg5: memref<8x1xf32, #tpu.memory_space<vmem>>, %arg6: memref<1x8x128xf32, #tpu.memory_space<vmem>>, %arg7: memref<4x256xf32, #tpu.memory_space<vmem>>, %arg8: memref<36x128xf32, #tpu.memory_space<vmem>>) attributes {dimension_semantics = [#tpu.dimension_semantics<parallel>, #tpu.dimension_semantics<parallel>], iteration_bounds = array<i64: 2, 3>, scalar_prefetch = 0 : i64, scratch_operands = 2 : i64, tpu.core_type = #tpu.core_type<tc>, window_params = [{transform_indices = @transform_0, window_bounds = array<i64: 1, 4, 128>}, {transform_indices = @transform_1, window_bounds = array<i64: 1, 4, 128>}, {pipeline_mode = #tpu.pipeline_mode<synchronous>, transform_indices = @transform_2, window_bounds = array<i64: 8, 36>}, {pipeline_mode = #tpu.pipeline_mode<synchronous>, transform_indices = @transform_3, window_bounds = array<i64: 8, 1>}, {transform_indices = @transform_4, window_bounds = array<i64: 1, 8, 128>}]} {
    %c0 = arith.constant 0 : index
    %c0_0 = arith.constant 0 : index
    %c0_1 = arith.constant 0 : index
    %0 = vector.load %arg2[%c0, %c0_0, %c0_1] : memref<1x4x128xf32, #tpu.memory_space<vmem>>, vector<1x4x128xf32>
    %1 = vector.shape_cast %0 : vector<1x4x128xf32> to vector<4x128xf32>
    %c0_2 = arith.constant 0 : index
    %c0_3 = arith.constant 0 : index
    %2 = vector.load %arg7[%c0_2, %c0_3] : memref<4x256xf32, #tpu.memory_space<vmem>>, vector<4x128xf32>
    tpu.vector_store %arg7[%c0_2, %c0_3], %1 {strides = array<i32>} : memref<4x256xf32, #tpu.memory_space<vmem>>, vector<4x128xf32>,
    %c0_4 = arith.constant 0 : index
    %c0_5 = arith.constant 0 : index
    %c0_6 = arith.constant 0 : index
    %3 = vector.load %arg3[%c0_4, %c0_5, %c0_6] : memref<1x4x128xf32, #tpu.memory_space<vmem>>, vector<1x4x128xf32>
    %4 = vector.shape_cast %3 : vector<1x4x128xf32> to vector<4x128xf32>
    %c0_7 = arith.constant 0 : index
    %c128 = arith.constant 128 : index
    %5 = vector.load %arg7[%c0_7, %c128] : memref<4x256xf32, #tpu.memory_space<vmem>>, vector<4x128xf32>
    tpu.vector_store %arg7[%c0_7, %c128], %4 {strides = array<i32>} : memref<4x256xf32, #tpu.memory_space<vmem>>, vector<4x128xf32>,
    %c0_8 = arith.constant 0 : index
    %c0_9 = arith.constant 0 : index
    %6 = vector.load %arg7[%c0_8, %c0_9] : memref<4x256xf32, #tpu.memory_space<vmem>>, vector<4x128xf32>
    %c0_10 = arith.constant 0 : index
    %c0_11 = arith.constant 0 : index
    %7 = vector.load %arg8[%c0_10, %c0_11] : memref<36x128xf32, #tpu.memory_space<vmem>>, vector<4x128xf32>
    tpu.vector_store %arg8[%c0_10, %c0_11], %6 {strides = array<i32>} : memref<36x128xf32, #tpu.memory_space<vmem>>, vector<4x128xf32>,
    %c0_12 = arith.constant 0 : index
    %c1 = arith.constant 1 : index
    %8 = vector.load %arg7[%c0_12, %c1] : memref<4x256xf32, #tpu.memory_space<vmem>>, vector<4x128xf32>
    %c4 = arith.constant 4 : index
    %c0_13 = arith.constant 0 : index
    %9 = vector.load %arg8[%c4, %c0_13] : memref<36x128xf32, #tpu.memory_space<vmem>>, vector<4x128xf32>
    tpu.vector_store %arg8[%c4, %c0_13], %8 {strides = array<i32>} : memref<36x128xf32, #tpu.memory_space<vmem>>, vector<4x128xf32>,
    %c0_14 = arith.constant 0 : index
    %c2 = arith.constant 2 : index
    %10 = vector.load %arg7[%c0_14, %c2] : memref<4x256xf32, #tpu.memory_space<vmem>>, vector<4x128xf32>
    %c8 = arith.constant 8 : index
    %c0_15 = arith.constant 0 : index
    %11 = vector.load %arg8[%c8, %c0_15] : memref<36x128xf32, #tpu.memory_space<vmem>>, vector<4x128xf32>
    tpu.vector_store %arg8[%c8, %c0_15], %10 {strides = array<i32>} : memref<36x128xf32, #tpu.memory_space<vmem>>, vector<4x128xf32>,
    %c0_16 = arith.constant 0 : index
    %c20 = arith.constant 20 : index
    %12 = vector.load %arg7[%c0_16, %c20] : memref<4x256xf32, #tpu.memory_space<vmem>>, vector<4x128xf32>
    %c12 = arith.constant 12 : index
    %c0_17 = arith.constant 0 : index
    %13 = vector.load %arg8[%c12, %c0_17] : memref<36x128xf32, #tpu.memory_space<vmem>>, vector<4x128xf32>
    tpu.vector_store %arg8[%c12, %c0_17], %12 {strides = array<i32>} : memref<36x128xf32, #tpu.memory_space<vmem>>, vector<4x128xf32>,
    %c0_18 = arith.constant 0 : index
    %c21 = arith.constant 21 : index
    %14 = vector.load %arg7[%c0_18, %c21] : memref<4x256xf32, #tpu.memory_space<vmem>>, vector<4x128xf32>
    %c16 = arith.constant 16 : index
    %c0_19 = arith.constant 0 : index
    %15 = vector.load %arg8[%c16, %c0_19] : memref<36x128xf32, #tpu.memory_space<vmem>>, vector<4x128xf32>
    tpu.vector_store %arg8[%c16, %c0_19], %14 {strides = array<i32>} : memref<36x128xf32, #tpu.memory_space<vmem>>, vector<4x128xf32>,
    %c0_20 = arith.constant 0 : index
    %c22 = arith.constant 22 : index
    %16 = vector.load %arg7[%c0_20, %c22] : memref<4x256xf32, #tpu.memory_space<vmem>>, vector<4x128xf32>
    %c20_21 = arith.constant 20 : index
    %c0_22 = arith.constant 0 : index
    %17 = vector.load %arg8[%c20_21, %c0_22] : memref<36x128xf32, #tpu.memory_space<vmem>>, vector<4x128xf32>
    tpu.vector_store %arg8[%c20_21, %c0_22], %16 {strides = array<i32>} : memref<36x128xf32, #tpu.memory_space<vmem>>, vector<4x128xf32>,
    %c0_23 = arith.constant 0 : index
    %c40 = arith.constant 40 : index
    %18 = vector.load %arg7[%c0_23, %c40] : memref<4x256xf32, #tpu.memory_space<vmem>>, vector<4x128xf32>
    %c24 = arith.constant 24 : index
    %c0_24 = arith.constant 0 : index
    %19 = vector.load %arg8[%c24, %c0_24] : memref<36x128xf32, #tpu.memory_space<vmem>>, vector<4x128xf32>
    tpu.vector_store %arg8[%c24, %c0_24], %18 {strides = array<i32>} : memref<36x128xf32, #tpu.memory_space<vmem>>, vector<4x128xf32>,
    %c0_25 = arith.constant 0 : index
    %c41 = arith.constant 41 : index
    %20 = vector.load %arg7[%c0_25, %c41] : memref<4x256xf32, #tpu.memory_space<vmem>>, vector<4x128xf32>
    %c28 = arith.constant 28 : index
    %c0_26 = arith.constant 0 : index
    %21 = vector.load %arg8[%c28, %c0_26] : memref<36x128xf32, #tpu.memory_space<vmem>>, vector<4x128xf32>
    tpu.vector_store %arg8[%c28, %c0_26], %20 {strides = array<i32>} : memref<36x128xf32, #tpu.memory_space<vmem>>, vector<4x128xf32>,
    %c0_27 = arith.constant 0 : index
    %c42 = arith.constant 42 : index
    %22 = vector.load %arg7[%c0_27, %c42] : memref<4x256xf32, #tpu.memory_space<vmem>>, vector<4x128xf32>
    %c32 = arith.constant 32 : index
    %c0_28 = arith.constant 0 : index
    %23 = vector.load %arg8[%c32, %c0_28] : memref<36x128xf32, #tpu.memory_space<vmem>>, vector<4x128xf32>
    tpu.vector_store %arg8[%c32, %c0_28], %22 {strides = array<i32>} : memref<36x128xf32, #tpu.memory_space<vmem>>, vector<4x128xf32>,
    %c0_29 = arith.constant 0 : index
    %c0_30 = arith.constant 0 : index
    %24 = vector.load %arg4[%c0_29, %c0_30] : memref<8x36xf32, #tpu.memory_space<vmem>>, vector<8x36xf32>
    %c0_31 = arith.constant 0 : index
    %c0_32 = arith.constant 0 : index
    %25 = vector.load %arg8[%c0_31, %c0_32] : memref<36x128xf32, #tpu.memory_space<vmem>>, vector<36x128xf32>
    %cst = arith.constant dense<0.000000e+00> : vector<8x128xf32>
    %26 = tpu.matmul %24, %25, %cst {dimension_numbers = #tpu.dot_dimension_numbers<[1], [0], [0], [1], [0, 0, 1, 1], [], []>} : vector<8x36xf32>, vector<36x128xf32>, vector<8x128xf32> -> vector<8x128xf32>
    %c0_33 = arith.constant 0 : index
    %c0_34 = arith.constant 0 : index
    %27 = vector.load %arg5[%c0_33, %c0_34] : memref<8x1xf32, #tpu.memory_space<vmem>>, vector<8x1xf32>
    %28 = vector.broadcast %27 : vector<8x1xf32> to vector<8x128xf32>
    %29 = arith.addf %26, %28 : vector<8x128xf32>
    %c0_35 = arith.constant 0 : index
    %c0_36 = arith.constant 0 : index
    %c0_37 = arith.constant 0 : index
    %30 = vector.load %arg6[%c0_35, %c0_36, %c0_37] : memref<1x8x128xf32, #tpu.memory_space<vmem>>, vector<1x8x128xf32>
    %31 = vector.shape_cast %30 : vector<1x8x128xf32> to vector<8x128xf32>
    %32 = vector.shape_cast %29 : vector<8x128xf32> to vector<1x8x128xf32>
    tpu.vector_store %arg6[%c0_35, %c0_36, %c0_37], %32 {strides = array<i32>} : memref<1x8x128xf32, #tpu.memory_space<vmem>>, vector<1x8x128xf32>,
    return
  }
  func.func @transform_0(%arg0: i32, %arg1: i32) -> (i32, i32, i32) {
    %c0_i32 = arith.constant 0 : i32
    %c0_i32_0 = arith.constant 0 : i32
    return %arg0, %c0_i32, %arg1 : i32, i32, i32
  }
  func.func @transform_1(%arg0: i32, %arg1: i32) -> (i32, i32, i32) {
    %c1_i32 = arith.constant 1 : i32
    %0 = arith.addi %arg1, %c1_i32 : i32
    %c1_i32_0 = arith.constant 1 : i32
    %1 = arith.muli %0, %c1_i32_0 : i32
    %c0_i32 = arith.constant 0 : i32
    %c0_i32_1 = arith.constant 0 : i32
    return %arg0, %c0_i32, %1 : i32, i32, i32
  }
  func.func @transform_2(%arg0: i32, %arg1: i32) -> (i32, i32) {
    %c0_i32 = arith.constant 0 : i32
    %c0_i32_0 = arith.constant 0 : i32
    %c0_i32_1 = arith.constant 0 : i32
    return %c0_i32, %c0_i32_0 : i32, i32
  }
  func.func @transform_3(%arg0: i32, %arg1: i32) -> (i32, i32) {
    %c0_i32 = arith.constant 0 : i32
    %c0_i32_0 = arith.constant 0 : i32
    %c0_i32_1 = arith.constant 0 : i32
    return %c0_i32, %c0_i32_0 : i32, i32
  }
  func.func @transform_4(%arg0: i32, %arg1: i32) -> (i32, i32, i32) {
    %c0_i32 = arith.constant 0 : i32
    %c0_i32_0 = arith.constant 0 : i32
    return %arg0, %c0_i32, %arg1 : i32, i32, i32
  }
}

module attributes {stable_mosaic.version = 11 : i64} {
  func.func @_conv_patch_kernel(%arg0: i32, %arg1: i32, %arg2: memref<1x4x128xf32, #tpu.memory_space<vmem>>, %arg3: memref<1x4x128xf32, #tpu.memory_space<vmem>>, %arg4: memref<8x36xf32, #tpu.memory_space<vmem>>, %arg5: memref<8x1xf32, #tpu.memory_space<vmem>>, %arg6: memref<1x8x128xf32, #tpu.memory_space<vmem>>, %arg7: memref<4x256xf32, #tpu.memory_space<vmem>>, %arg8: memref<36x128xf32, #tpu.memory_space<vmem>>) attributes {dimension_semantics = [#tpu.dimension_semantics<parallel>, #tpu.dimension_semantics<parallel>], iteration_bounds = array<i64: 2, 3>, scalar_prefetch = 0 : i64, scratch_operands = 2 : i64, tpu.core_type = #tpu.core_type<tc>, window_params = [{transform_indices = @transform_0, window_bounds = array<i64: 1, 4, 128>}, {transform_indices = @transform_1, window_bounds = array<i64: 1, 4, 128>}, {pipeline_mode = #tpu.pipeline_mode<synchronous>, transform_indices = @transform_2, window_bounds = array<i64: 8, 36>}, {pipeline_mode = #tpu.pipeline_mode<synchronous>, transform_indices = @transform_3, window_bounds = array<i64: 8, 1>}, {transform_indices = @transform_4, window_bounds = array<i64: 1, 8, 128>}]} {
    %c0 = arith.constant 0 : index
    %c0_0 = arith.constant 0 : index
    %c0_1 = arith.constant 0 : index
    %0 = vector.load %arg2[%c0, %c0_0, %c0_1] : memref<1x4x128xf32, #tpu.memory_space<vmem>>, vector<1x4x128xf32>
    %1 = vector.shape_cast %0 : vector<1x4x128xf32> to vector<4x128xf32>
    %c0_2 = arith.constant 0 : index
    %c0_3 = arith.constant 0 : index
    %2 = vector.load %arg7[%c0_2, %c0_3] : memref<4x256xf32, #tpu.memory_space<vmem>>, vector<4x128xf32>
    tpu.vector_store %arg7[%c0_2, %c0_3], %1 {strides = array<i32>} : memref<4x256xf32, #tpu.memory_space<vmem>>, vector<4x128xf32>,
    %c0_4 = arith.constant 0 : index
    %c0_5 = arith.constant 0 : index
    %c0_6 = arith.constant 0 : index
    %3 = vector.load %arg3[%c0_4, %c0_5, %c0_6] : memref<1x4x128xf32, #tpu.memory_space<vmem>>, vector<1x4x128xf32>
    %4 = vector.shape_cast %3 : vector<1x4x128xf32> to vector<4x128xf32>
    %c0_7 = arith.constant 0 : index
    %c128 = arith.constant 128 : index
    %5 = vector.load %arg7[%c0_7, %c128] : memref<4x256xf32, #tpu.memory_space<vmem>>, vector<4x128xf32>
    tpu.vector_store %arg7[%c0_7, %c128], %4 {strides = array<i32>} : memref<4x256xf32, #tpu.memory_space<vmem>>, vector<4x128xf32>,
    %c0_8 = arith.constant 0 : index
    %c0_9 = arith.constant 0 : index
    %6 = vector.load %arg7[%c0_8, %c0_9] : memref<4x256xf32, #tpu.memory_space<vmem>>, vector<4x128xf32>
    %c0_10 = arith.constant 0 : index
    %c0_11 = arith.constant 0 : index
    %7 = vector.load %arg8[%c0_10, %c0_11] : memref<36x128xf32, #tpu.memory_space<vmem>>, vector<4x128xf32>
    tpu.vector_store %arg8[%c0_10, %c0_11], %6 {strides = array<i32>} : memref<36x128xf32, #tpu.memory_space<vmem>>, vector<4x128xf32>,
    %c0_12 = arith.constant 0 : index
    %c1 = arith.constant 1 : index
    %8 = vector.load %arg7[%c0_12, %c1] : memref<4x256xf32, #tpu.memory_space<vmem>>, vector<4x128xf32>
    %c4 = arith.constant 4 : index
    %c0_13 = arith.constant 0 : index
    %9 = vector.load %arg8[%c4, %c0_13] : memref<36x128xf32, #tpu.memory_space<vmem>>, vector<4x128xf32>
    tpu.vector_store %arg8[%c4, %c0_13], %8 {strides = array<i32>} : memref<36x128xf32, #tpu.memory_space<vmem>>, vector<4x128xf32>,
    %c0_14 = arith.constant 0 : index
    %c2 = arith.constant 2 : index
    %10 = vector.load %arg7[%c0_14, %c2] : memref<4x256xf32, #tpu.memory_space<vmem>>, vector<4x128xf32>
    %c8 = arith.constant 8 : index
    %c0_15 = arith.constant 0 : index
    %11 = vector.load %arg8[%c8, %c0_15] : memref<36x128xf32, #tpu.memory_space<vmem>>, vector<4x128xf32>
    tpu.vector_store %arg8[%c8, %c0_15], %10 {strides = array<i32>} : memref<36x128xf32, #tpu.memory_space<vmem>>, vector<4x128xf32>,
    %c0_16 = arith.constant 0 : index
    %c20 = arith.constant 20 : index
    %12 = vector.load %arg7[%c0_16, %c20] : memref<4x256xf32, #tpu.memory_space<vmem>>, vector<4x128xf32>
    %c12 = arith.constant 12 : index
    %c0_17 = arith.constant 0 : index
    %13 = vector.load %arg8[%c12, %c0_17] : memref<36x128xf32, #tpu.memory_space<vmem>>, vector<4x128xf32>
    tpu.vector_store %arg8[%c12, %c0_17], %12 {strides = array<i32>} : memref<36x128xf32, #tpu.memory_space<vmem>>, vector<4x128xf32>,
    %c0_18 = arith.constant 0 : index
    %c21 = arith.constant 21 : index
    %14 = vector.load %arg7[%c0_18, %c21] : memref<4x256xf32, #tpu.memory_space<vmem>>, vector<4x128xf32>
    %c16 = arith.constant 16 : index
    %c0_19 = arith.constant 0 : index
    %15 = vector.load %arg8[%c16, %c0_19] : memref<36x128xf32, #tpu.memory_space<vmem>>, vector<4x128xf32>
    tpu.vector_store %arg8[%c16, %c0_19], %14 {strides = array<i32>} : memref<36x128xf32, #tpu.memory_space<vmem>>, vector<4x128xf32>,
    %c0_20 = arith.constant 0 : index
    %c22 = arith.constant 22 : index
    %16 = vector.load %arg7[%c0_20, %c22] : memref<4x256xf32, #tpu.memory_space<vmem>>, vector<4x128xf32>
    %c20_21 = arith.constant 20 : index
    %c0_22 = arith.constant 0 : index
    %17 = vector.load %arg8[%c20_21, %c0_22] : memref<36x128xf32, #tpu.memory_space<vmem>>, vector<4x128xf32>
    tpu.vector_store %arg8[%c20_21, %c0_22], %16 {strides = array<i32>} : memref<36x128xf32, #tpu.memory_space<vmem>>, vector<4x128xf32>,
    %c0_23 = arith.constant 0 : index
    %c40 = arith.constant 40 : index
    %18 = vector.load %arg7[%c0_23, %c40] : memref<4x256xf32, #tpu.memory_space<vmem>>, vector<4x128xf32>
    %c24 = arith.constant 24 : index
    %c0_24 = arith.constant 0 : index
    %19 = vector.load %arg8[%c24, %c0_24] : memref<36x128xf32, #tpu.memory_space<vmem>>, vector<4x128xf32>
    tpu.vector_store %arg8[%c24, %c0_24], %18 {strides = array<i32>} : memref<36x128xf32, #tpu.memory_space<vmem>>, vector<4x128xf32>,
    %c0_25 = arith.constant 0 : index
    %c41 = arith.constant 41 : index
    %20 = vector.load %arg7[%c0_25, %c41] : memref<4x256xf32, #tpu.memory_space<vmem>>, vector<4x128xf32>
    %c28 = arith.constant 28 : index
    %c0_26 = arith.constant 0 : index
    %21 = vector.load %arg8[%c28, %c0_26] : memref<36x128xf32, #tpu.memory_space<vmem>>, vector<4x128xf32>
    tpu.vector_store %arg8[%c28, %c0_26], %20 {strides = array<i32>} : memref<36x128xf32, #tpu.memory_space<vmem>>, vector<4x128xf32>,
    %c0_27 = arith.constant 0 : index
    %c42 = arith.constant 42 : index
    %22 = vector.load %arg7[%c0_27, %c42] : memref<4x256xf32, #tpu.memory_space<vmem>>, vector<4x128xf32>
    %c32 = arith.constant 32 : index
    %c0_28 = arith.constant 0 : index
    %23 = vector.load %arg8[%c32, %c0_28] : memref<36x128xf32, #tpu.memory_space<vmem>>, vector<4x128xf32>
    tpu.vector_store %arg8[%c32, %c0_28], %22 {strides = array<i32>} : memref<36x128xf32, #tpu.memory_space<vmem>>, vector<4x128xf32>,
    %c0_29 = arith.constant 0 : index
    %c0_30 = arith.constant 0 : index
    %24 = vector.load %arg4[%c0_29, %c0_30] : memref<8x36xf32, #tpu.memory_space<vmem>>, vector<8x36xf32>
    %c0_31 = arith.constant 0 : index
    %c0_32 = arith.constant 0 : index
    %25 = vector.load %arg8[%c0_31, %c0_32] : memref<36x128xf32, #tpu.memory_space<vmem>>, vector<36x128xf32>
    %cst = arith.constant dense<0.000000e+00> : vector<8x128xf32>
    %26 = tpu.matmul %24, %25, %cst {dimension_numbers = #tpu.dot_dimension_numbers<[1], [0], [0], [1], [0, 0, 1, 1], [], []>} : vector<8x36xf32>, vector<36x128xf32>, vector<8x128xf32> -> vector<8x128xf32>
    %c0_33 = arith.constant 0 : index
    %c0_34 = arith.constant 0 : index
    %27 = vector.load %arg5[%c0_33, %c0_34] : memref<8x1xf32, #tpu.memory_space<vmem>>, vector<8x1xf32>
    %28 = vector.broadcast %27 : vector<8x1xf32> to vector<8x128xf32>
    %29 = arith.addf %26, %28 : vector<8x128xf32>
    %c0_35 = arith.constant 0 : index
    %c0_36 = arith.constant 0 : index
    %c0_37 = arith.constant 0 : index
    %30 = vector.load %arg6[%c0_35, %c0_36, %c0_37] : memref<1x8x128xf32, #tpu.memory_space<vmem>>, vector<1x8x128xf32>
    %31 = vector.shape_cast %30 : vector<1x8x128xf32> to vector<8x128xf32>
    %32 = vector.shape_cast %29 : vector<8x128xf32> to vector<1x8x128xf32>
    tpu.vector_store %arg6[%c0_35, %c0_36, %c0_37], %32 {strides = array<i32>} : memref<1x8x128xf32, #tpu.memory_space<vmem>>, vector<1x8x128xf32>,
    return
  }
  func.func @transform_0(%arg0: i32, %arg1: i32) -> (i32, i32, i32) {
    %c0_i32 = arith.constant 0 : i32
    %c0_i32_0 = arith.constant 0 : i32
    return %arg0, %c0_i32, %arg1 : i32, i32, i32
  }
  func.func @transform_1(%arg0: i32, %arg1: i32) -> (i32, i32, i32) {
    %c1_i32 = arith.constant 1 : i32
    %0 = arith.addi %arg1, %c1_i32 : i32
    %c1_i32_0 = arith.constant 1 : i32
    %1 = arith.muli %0, %c1_i32_0 : i32
    %c0_i32 = arith.constant 0 : i32
    %c0_i32_1 = arith.constant 0 : i32
    return %arg0, %c0_i32, %1 : i32, i32, i32
  }
  func.func @transform_2(%arg0: i32, %arg1: i32) -> (i32, i32) {
    %c0_i32 = arith.constant 0 : i32
    %c0_i32_0 = arith.constant 0 : i32
    %c0_i32_1 = arith.constant 0 : i32
    return %c0_i32, %c0_i32_0 : i32, i32
  }
  func.func @transform_3(%arg0: i32, %arg1: i32) -> (i32, i32) {
    %c0_i32 = arith.constant 0 : i32
    %c0_i32_0 = arith.constant 0 : i32
    %c0_i32_1 = arith.constant 0 : i32
    return %c0_i32, %c0_i32_0 : i32, i32
  }
  func.func @transform_4(%arg0: i32, %arg1: i32) -> (i32, i32, i32) {
    %c0_i32 = arith.constant 0 : i32
    %c0_i32_0 = arith.constant 0 : i32
    return %arg0, %c0_i32, %arg1 : i32, i32, i32
  }
}

</mosaic_0001>

<llo_original>
// kernel: tpu_custom_call.1
$region0: #{tpu_custom_call.1}
  #allocation0 [shape = 'u32[]', space=smem, size = 0x4, offset = 0x4, fixed_abs, tag = 'smem constant byte address 0x4 - core index']
  #allocation1 [shape = 'u32[72,128]{1,0:T(1,128)}', space=vmem, size = 0x9000, scoped, tag = 'internal scratch']
  #allocation2 [shape = 'f32[4,256]{1,0:T(4,128)}', space=vmem, size = 0x1000, scoped, tag = 'scratch operand']
  #allocation3 [shape = 'f32[36,128]{1,0:T(8,128)}', space=vmem, size = 0x5000, scoped, tag = 'scratch operand']
  %s0 = inlined_call_operand.hbm [shape: f32[2,4,520], index: 0, kind: input, shape index: {}]
  %s1 = inlined_call_operand.hbm [shape: f32[2,4,520], index: 1, kind: input, shape index: {}]
  %s2 = inlined_call_operand.vmem [shape: f32[8,36], index: 2, kind: input, shape index: {}]
  %s3 = inlined_call_operand.vmem [shape: f32[8,1], index: 3, kind: input, shape index: {}]
  %s4 = inlined_call_operand.hbm [shape: f32[2,8,384], index: 4, kind: output, shape index: {}]
  %s5 = sld [smem:[#allocation0]]
  $region57: #{tpu_custom_call.1} parent=0
    _
  %s7 = ssub.s32 1, %s5
  %s8 = scalar_select 0, %s7, %s5
  $region1: #{tpu_custom_call.1} parent=0
    #allocation4 [shape = 'u8[4096]{0}', space=vmem, size = 0x1000, scoped, tag = 'input window, operand 0']
    #allocation5 [shape = 's32[2]{0}', space=sflag, size = 0x8, scoped, tag = 'scoped memory for tpu_custom_call.1']
    #allocation6 [shape = 's32[2]{0}', space=sflag, size = 0x8, scoped, tag = 'scoped memory for tpu_custom_call.1']
    #allocation7 [shape = 'u8[4096]{0}', space=vmem, size = 0x1000, scoped, tag = 'input window, operand 1']
    #allocation8 [shape = 's32[2]{0}', space=sflag, size = 0x8, scoped, tag = 'scoped memory for tpu_custom_call.1']
    #allocation9 [shape = 'u8[8192]{0}', space=vmem, size = 0x2000, scoped, tag = 'output window, operand 0']
    %9 = vsyncpa [#allocation5], 0
    %s10 = scalar_lea.sflag [#allocation5], 1
    %11 = vsyncpa %s10, 0
    %12 = vsyncpa [#allocation8], 0
    %s13 = scalar_lea.sflag [#allocation8], 1
    %14 = vsyncpa %s13, 0
    %15 = vsyncpa [#allocation6], 0
    %s16 = scalar_lea.sflag [#allocation6], 1
    %17 = vsyncpa %s16, 0
    loop: start=0, step=1, limit=8
    $region2: #{tpu_custom_call.1} parent=1 // loop_pre_header
      _
    $region3: #{tpu_custom_call.1} parent=1 // loop_header
      %s19 = sphi 0, %s23
      %p20 = scmp.ge.s32.totalorder %s19, 8
      %s26 = sphi 0, %s38
      %s27 = sphi 0, %s34
      %s28 = sphi 0, %s26
      %s29 = sphi 0, %s27
      %s30 = sphi 0, %s28
      %s31 = sphi 0, %s29
      %s43 = sphi 0, %s45
      %s46 = sphi 0, %s43
      %s47 = sphi 0, %s46
      %s63 = sphi 0, %s47
      %s73 = sphi 0, %s75
      %s76 = sphi 0, %s73
      %s77 = sphi 0, %s76
      %s93 = sphi 0, %s77
      %s97 = sphi 0, %s97
      %s99 = sphi 0, %s97
      %s100 = sphi 0, %s99
      %s114 = sphi 0, %s100
      %s118 = sphi 0, %s118
      %s120 = sphi 0, %s118
      %s121 = sphi 0, %s120
      %s135 = sphi 0, %s121
      %s143 = sphi 0, %s145
      %s146 = sphi 0, %s143
      %s147 = sphi 0, %s146
      %s163 = sphi 0, %s147
    $region4: #{tpu_custom_call.1} parent=1 // loop_header_branch
      %22 = sbr.rel (%p20) target = $region8
    $region5: #{tpu_custom_call.1} parent=1 // loop_body
      %s24 = ssub.s32 %s19, 1
      %s25 = ssub.s32 %s19, 2
      %s32 = sadd.s32 1, %s27
      %p33 = scmp.ge.s32.totalorder %s32, 3
      %s34 = scalar_select %p33, 0, %s32
      %s35 = sadd.s32 1, %s26
      %s36 = scalar_select %p33, %s35, %s26
      %p37 = scmp.ge.s32.totalorder %s36, 2
      %s38 = scalar_select %p37, 0, %s36
      %s39 = ssub.s32 %s26, %s38
      %s40 = ssub.s32 %s27, %s34
      %s41 = sor.u32 %s39, %s40
      %p42 = scmp.eq.s32.totalorder %s41, 0
      %s44 = sadd.s32 %s43, 1
      %s45 = scalar_select %p42, %s43, %s44
      %p48 = pneg %p42
      %p49 = scmp.eq.s32.totalorder %s19, 5
      %p50 = por %p48, %p49
      %p51 = scmp.ne.s32.totalorder %s43, %s46
      %p52 = scmp.eq.s32.totalorder %s19, 0
      %p53 = por %p51, %p52
      %p54 = scmp.ne.s32.totalorder %s43, %s46
      %p55 = scmp.eq.s32.totalorder %s24, 5
      %p56 = por %p54, %p55
      %p57 = scmp.ne.s32.totalorder %s46, %s47
      %p58 = scmp.eq.s32.totalorder %s24, 0
      %p59 = por %p57, %p58
      %p60 = scmp.ne.s32.totalorder %s46, %s47
      %p61 = scmp.eq.s32.totalorder %s25, 5
      %p62 = por %p60, %p61
      %p64 = scmp.ne.s32.totalorder %s47, %s63
      %p65 = scmp.eq.s32.totalorder %s25, 0
      %p66 = por %p64, %p65
      %s67 = sadd.s32 %s27, 1
      %s68 = sadd.s32 %s34, 1
      %s69 = ssub.s32 %s26, %s38
      %s70 = ssub.s32 %s67, %s68
      %s71 = sor.u32 %s69, %s70
      %p72 = scmp.eq.s32.totalorder %s71, 0
      %s74 = sadd.s32 %s73, 1
      %s75 = scalar_select %p72, %s73, %s74
      %p78 = pneg %p72
      %p79 = scmp.eq.s32.totalorder %s19, 5
      %p80 = por %p78, %p79
      %p81 = scmp.ne.s32.totalorder %s73, %s76
      %p82 = scmp.eq.s32.totalorder %s19, 0
      %p83 = por %p81, %p82
      %p84 = scmp.ne.s32.totalorder %s73, %s76
      %p85 = scmp.eq.s32.totalorder %s24, 5
      %p86 = por %p84, %p85
      %p87 = scmp.ne.s32.totalorder %s76, %s77
      %p88 = scmp.eq.s32.totalorder %s24, 0
      %p89 = por %p87, %p88
      %p90 = scmp.ne.s32.totalorder %s76, %s77
      %p91 = scmp.eq.s32.totalorder %s25, 5
      %p92 = por %p90, %p91
      %p94 = scmp.ne.s32.totalorder %s77, %s93
      %p95 = scmp.eq.s32.totalorder %s25, 0
      %p96 = por %p94, %p95
      %s98 = sadd.s32 %s97, 1
      %p101 = scmp.eq.s32.totalorder %s19, 5
      %p102 = scmp.ne.s32.totalorder %s97, %s99
      %p103 = scmp.eq.s32.totalorder %s19, 0
      %p104 = por %p102, %p103
      %p105 = scmp.ne.s32.totalorder %s97, %s99
      %p106 = scmp.eq.s32.totalorder %s24, 5
      %p107 = por %p105, %p106
      %p108 = scmp.ne.s32.totalorder %s99, %s100
      %p109 = scmp.eq.s32.totalorder %s24, 0
      %p110 = por %p108, %p109
      %p111 = scmp.ne.s32.totalorder %s99, %s100
      %p112 = scmp.eq.s32.totalorder %s25, 5
      %p113 = por %p111, %p112
      %p115 = scmp.ne.s32.totalorder %s100, %s114
      %p116 = scmp.eq.s32.totalorder %s25, 0
      %p117 = por %p115, %p116
      %s119 = sadd.s32 %s118, 1
      %p122 = scmp.eq.s32.totalorder %s19, 5
      %p123 = scmp.ne.s32.totalorder %s118, %s120
      %p124 = scmp.eq.s32.totalorder %s19, 0
      %p125 = por %p123, %p124
      %p126 = scmp.ne.s32.totalorder %s118, %s120
      %p127 = scmp.eq.s32.totalorder %s24, 5
      %p128 = por %p126, %p127
      %p129 = scmp.ne.s32.totalorder %s120, %s121
      %p130 = scmp.eq.s32.totalorder %s24, 0
      %p131 = por %p129, %p130
      %p132 = scmp.ne.s32.totalorder %s120, %s121
      %p133 = scmp.eq.s32.totalorder %s25, 5
      %p134 = por %p132, %p133
      %p136 = scmp.ne.s32.totalorder %s121, %s135
      %p137 = scmp.eq.s32.totalorder %s25, 0
      %p138 = por %p136, %p137
      %s139 = ssub.s32 %s26, %s38
      %s140 = ssub.s32 %s27, %s34
      %s141 = sor.u32 %s139, %s140
      %p142 = scmp.eq.s32.totalorder %s141, 0
      %s144 = sadd.s32 %s143, 1
      %s145 = scalar_select %p142, %s143, %s144
      %p148 = pneg %p142
      %p149 = scmp.eq.s32.totalorder %s19, 5
      %p150 = por %p148, %p149
      %p151 = scmp.ne.s32.totalorder %s143, %s146
      %p152 = scmp.eq.s32.totalorder %s19, 0
      %p153 = por %p151, %p152
      %p154 = scmp.ne.s32.totalorder %s143, %s146
      %p155 = scmp.eq.s32.totalorder %s24, 5
      %p156 = por %p154, %p155
      %p157 = scmp.ne.s32.totalorder %s146, %s147
      %p158 = scmp.eq.s32.totalorder %s24, 0
      %p159 = por %p157, %p158
      %p160 = scmp.ne.s32.totalorder %s146, %s147
      %p161 = scmp.eq.s32.totalorder %s25, 5
      %p162 = por %p160, %p161
      %p164 = scmp.ne.s32.totalorder %s147, %s163
      %p165 = scmp.eq.s32.totalorder %s25, 0
      %p166 = por %p164, %p165
      %p167 = scmp.le.s32.totalorder 1, %s19
      %p168 = scmp.lt.s32.totalorder %s19, 7
      %p169 = pnand %p167, %p168
      %p170 = pneg %p169
      // Predicated region
      $region9: #{tpu_custom_call.1} parent=5 // pred_check
        _
      $region10: #{tpu_custom_call.1} parent=5 // pred_check_branch
        %172 = sbr.rel (%p169) target = $region12
      $region11: #{tpu_custom_call.1} parent=5 // pred_region
        %s173 = ssub.s32 %s19, 1
        // Predicated region
        $region13: #{tpu_custom_call.1} parent=11 // pred_check
          %p174 = pneg %p110
        $region14: #{tpu_custom_call.1} parent=11 // pred_check_branch
          %176 = sbr.rel (%p174) target = $region16
        $region15: #{tpu_custom_call.1} parent=11 // pred_region
          _
        $region16: #{tpu_custom_call.1} parent=11 // pred_fallthru
          _
        // Predicated region
        $region17: #{tpu_custom_call.1} parent=11 // pred_check
          %p177 = pneg %p131
        $region18: #{tpu_custom_call.1} parent=11 // pred_check_branch
          %179 = sbr.rel (%p177) target = $region20
        $region19: #{tpu_custom_call.1} parent=11 // pred_region
          _
        $region20: #{tpu_custom_call.1} parent=11 // pred_fallthru
          _
      $region12: #{tpu_custom_call.1} parent=5 // pred_fallthru
        _
      %p180 = scmp.lt.s32.totalorder %s19, 6
      // Predicated region
      $region21: #{tpu_custom_call.1} parent=5 // pred_check
        %p181 = pneg %p180
      $region22: #{tpu_custom_call.1} parent=5 // pred_check_branch
        %183 = sbr.rel (%p181) target = $region24
      $region23: #{tpu_custom_call.1} parent=5 // pred_region
        // Predicated region
        $region25: #{tpu_custom_call.1} parent=23 // pred_check
          %p184 = pneg %p53
        $region26: #{tpu_custom_call.1} parent=23 // pred_check_branch
          %186 = sbr.rel (%p184) target = $region28
        $region27: #{tpu_custom_call.1} parent=23 // pred_region
          %s187 = sand.u32 %s43, 1
          %s188 = scalar_lea.sflag [#allocation5], %s187
          %s189 = sand.u32 %s43, 1
          %s190 = smul.addr %s189, 4
          %s191 = scalar_lea.vmem [#allocation4], %s190
          %193 = vsyncadd %s188, 0
          %s194 = smul.addr %s26, 5
          %s195 = sadd.s32 %s27, %s194
          %s196 = smul.addr %s195, 4
          %s197 = scalar_lea.hbm %s0, %s196
          %s199 = sshll.u32 %s197, 4
          %s200 = int_to_ptr.hbm [resolvable:$true] %s199
          %s201 = sshll.u32 %s191, 4
          %s202 = int_to_ptr.vmem [resolvable:$true] %s201
          %204 = dma.hbm_to_vmem [thread:$0]  %s200, 64, %s202, %s188
        $region28: #{tpu_custom_call.1} parent=23 // pred_fallthru
          _
        // Predicated region
        $region29: #{tpu_custom_call.1} parent=23 // pred_check
          %p205 = pneg %p83
        $region30: #{tpu_custom_call.1} parent=23 // pred_check_branch
          %207 = sbr.rel (%p205) target = $region32
        $region31: #{tpu_custom_call.1} parent=23 // pred_region
          %s208 = sand.u32 %s73, 1
          %s209 = scalar_lea.sflag [#allocation8], %s208
          %s210 = sand.u32 %s73, 1
          %s211 = smul.addr %s210, 4
          %s212 = scalar_lea.vmem [#allocation7], %s211
          %s213 = sadd.s32 %s27, 1
          %215 = vsyncadd %s209, 0
          %s216 = smul.addr %s26, 5
          %s217 = sadd.s32 %s213, %s216
          %s218 = smul.addr %s217, 4
          %s219 = scalar_lea.hbm %s1, %s218
          %s221 = sshll.u32 %s219, 4
          %s222 = int_to_ptr.hbm [resolvable:$true] %s221
          %s223 = sshll.u32 %s212, 4
          %s224 = int_to_ptr.vmem [resolvable:$true] %s223
          %226 = dma.hbm_to_vmem [thread:$0]  %s222, 64, %s224, %s209
        $region32: #{tpu_custom_call.1} parent=23 // pred_fallthru
          _
      $region24: #{tpu_custom_call.1} parent=5 // pred_fallthru
        _
      %p227 = scmp.le.s32.totalorder 1, %s19
      %p228 = scmp.lt.s32.totalorder %s19, 7
      %p229 = pnand %p227, %p228
      %p230 = pneg %p229
      // Predicated region
      $region33: #{tpu_custom_call.1} parent=5 // pred_check
        _
      $region34: #{tpu_custom_call.1} parent=5 // pred_check_branch
        %232 = sbr.rel (%p229) target = $region36
      $region35: #{tpu_custom_call.1} parent=5 // pred_region
        %s233 = ssub.s32 %s19, 1
        %s234 = sand.u32 %s46, 1
        %s235 = scalar_lea.sflag [#allocation5], %s234
        %s236 = sand.u32 %s46, 1
        %s237 = smul.addr %s236, 4
        %s238 = scalar_lea.vmem [#allocation4], %s237
        // Predicated region
        $region37: #{tpu_custom_call.1} parent=35 // pred_check
          %p239 = pneg %p59
        $region38: #{tpu_custom_call.1} parent=35 // pred_check_branch
          %241 = sbr.rel (%p239) target = $region40
        $region39: #{tpu_custom_call.1} parent=35 // pred_region
          %243 = dma.done %s235, 64
        $region40: #{tpu_custom_call.1} parent=35 // pred_fallthru
          _
        %s244 = sand.u32 %s76, 1
        %s245 = scalar_lea.sflag [#allocation8], %s244
        %s246 = sand.u32 %s76, 1
        %s247 = smul.addr %s246, 4
        %s248 = scalar_lea.vmem [#allocation7], %s247
        // Predicated region
        $region41: #{tpu_custom_call.1} parent=35 // pred_check
          %p249 = pneg %p89
        $region42: #{tpu_custom_call.1} parent=35 // pred_check_branch
          %251 = sbr.rel (%p249) target = $region44
        $region43: #{tpu_custom_call.1} parent=35 // pred_region
          %253 = dma.done %s245, 64
        $region44: #{tpu_custom_call.1} parent=35 // pred_fallthru
          _
        %s254 = sand.u32 %s46, 1
        %s255 = scalar_lea.sflag [#allocation5], %s254
        %s256 = sand.u32 %s46, 1
        %s257 = smul.addr %s256, 4
        %s258 = scalar_lea.vmem [#allocation4], %s257
        %p259 = pneg %p59
        %p260 = pneg %p56
        %s261 = sand.u32 %s76, 1
        %s262 = scalar_lea.sflag [#allocation8], %s261
        %s263 = sand.u32 %s76, 1
        %s264 = smul.addr %s263, 4
        %s265 = scalar_lea.vmem [#allocation7], %s264
        %p266 = pneg %p89
        %p267 = pneg %p86
        %p268 = pneg %p110
        %p269 = pneg %p107
        %p270 = pneg %p131
        %p271 = pneg %p128
        %p272 = pneg %p159
        %p273 = pneg %p156
        %s274 = sand.u32 %s146, 1
        %s275 = scalar_lea.sflag [#allocation6], %s274
        %s276 = sand.u32 %s146, 1
        %s277 = smul.addr %s276, 8
        %s278 = scalar_lea.vmem [#allocation9], %s277
        %s279 = sadd.s32 %s29, 1
        %v280 = vld [vmem:[%s238] sm:$0xf]
        %281 = vst [vmem:[#allocation2] sm:$0xf] %v280
        %v282 = vld [vmem:[%s248] sm:$0xf]
        %283 = vst [vmem:[#allocation2 + $0x4] sm:$0xf] %v282
        %v284 = vld [vmem:[#allocation2] sm:$0xf]
        %285 = vst [vmem:[#allocation3] sm:$0xf] %v284
        %v286 = vld [vmem:[#allocation2] sm:$0xff]
        %288 = vst [vmem:[#allocation1] ss:$2 sm:$0xff] %v286
        %v289 = vld.sshfl [vmem:[#allocation1] sm:$0xff pattern:$0x75316420]
        %v290 = vld.sshfl [vmem:[#allocation1 + $0x8] sm:$0xff pattern:$0x75316420]
        %291 = vrot.lane.b32.xlu0 %v289, 127
        %v292 = vpop.permute.xlu0 %291
        %293 = vrot.lane.b32.xlu0 %v290, 127
        %v294 = vpop.permute.xlu0 %293
        %vm295 = vcmask 1039360
        %v296 = vsel %vm295, %v292, %v294
        %298 = vst [vmem:[#allocation3 + $0x4] sm:$0xf] %v296
        %v299 = vld [vmem:[#allocation2] sm:$0xff]
        %301 = vst [vmem:[#allocation1] ss:$2 sm:$0xff] %v299
        %v302 = vld.sshfl [vmem:[#allocation1] sm:$0xff pattern:$0x75316420]
        %v303 = vld.sshfl [vmem:[#allocation1 + $0x8] sm:$0xff pattern:$0x75316420]
        %304 = vrot.lane.b32.xlu0 %v302, 126
        %v305 = vpop.permute.xlu0 %304
        %306 = vrot.lane.b32.xlu0 %v303, 126
        %v307 = vpop.permute.xlu0 %306
        %vm308 = vcmask 1031168
        %v309 = vsel %vm308, %v305, %v307
        %311 = vst [vmem:[#allocation3 + $0x8] sm:$0xf] %v309
        %v312 = vld [vmem:[#allocation2] sm:$0xff]
        %314 = vst [vmem:[#allocation1] ss:$2 sm:$0xff] %v312
        %v315 = vld.sshfl [vmem:[#allocation1] sm:$0xff pattern:$0x75316420]
        %v316 = vld.sshfl [vmem:[#allocation1 + $0x8] sm:$0xff pattern:$0x75316420]
        %317 = vrot.lane.b32.xlu0 %v315, 108
        %v318 = vpop.permute.xlu0 %317
        %319 = vrot.lane.b32.xlu0 %v316, 108
        %v320 = vpop.permute.xlu0 %319
        %vm321 = vcmask 883712
        %v322 = vsel %vm321, %v318, %v320
        %324 = vst [vmem:[#allocation3 + $0xc] sm:$0xf] %v322
        %v325 = vld [vmem:[#allocation2] sm:$0xff]
        %327 = vst [vmem:[#allocation1] ss:$2 sm:$0xff] %v325
        %v328 = vld.sshfl [vmem:[#allocation1] sm:$0xff pattern:$0x75316420]
        %v329 = vld.sshfl [vmem:[#allocation1 + $0x8] sm:$0xff pattern:$0x75316420]
        %330 = vrot.lane.b32.xlu0 %v328, 107
        %v331 = vpop.permute.xlu0 %330
        %332 = vrot.lane.b32.xlu0 %v329, 107
        %v333 = vpop.permute.xlu0 %332
        %vm334 = vcmask 875520
        %v335 = vsel %vm334, %v331, %v333
        %337 = vst [vmem:[#allocation3 + $0x10] sm:$0xf] %v335
        %v338 = vld [vmem:[#allocation2] sm:$0xff]
        %340 = vst [vmem:[#allocation1] ss:$2 sm:$0xff] %v338
        %v341 = vld.sshfl [vmem:[#allocation1] sm:$0xff pattern:$0x75316420]
        %v342 = vld.sshfl [vmem:[#allocation1 + $0x8] sm:$0xff pattern:$0x75316420]
        %343 = vrot.lane.b32.xlu0 %v341, 106
        %v344 = vpop.permute.xlu0 %343
        %345 = vrot.lane.b32.xlu0 %v342, 106
        %v346 = vpop.permute.xlu0 %345
        %vm347 = vcmask 867328
        %v348 = vsel %vm347, %v344, %v346
        %350 = vst [vmem:[#allocation3 + $0x14] sm:$0xf] %v348
        %v351 = vld [vmem:[#allocation2] sm:$0xff]
        %353 = vst [vmem:[#allocation1] ss:$2 sm:$0xff] %v351
        %v354 = vld.sshfl [vmem:[#allocation1] sm:$0xff pattern:$0x75316420]
        %v355 = vld.sshfl [vmem:[#allocation1 + $0x8] sm:$0xff pattern:$0x75316420]
        %356 = vrot.lane.b32.xlu0 %v354, 88
        %v357 = vpop.permute.xlu0 %356
        %358 = vrot.lane.b32.xlu0 %v355, 88
        %v359 = vpop.permute.xlu0 %358
        %vm360 = vcmask 719872
        %v361 = vsel %vm360, %v357, %v359
        %363 = vst [vmem:[#allocation3 + $0x18] sm:$0xf] %v361
        %v364 = vld [vmem:[#allocation2] sm:$0xff]
        %366 = vst [vmem:[#allocation1] ss:$2 sm:$0xff] %v364
        %v367 = vld.sshfl [vmem:[#allocation1] sm:$0xff pattern:$0x75316420]
        %v368 = vld.sshfl [vmem:[#allocation1 + $0x8] sm:$0xff pattern:$0x75316420]
        %369 = vrot.lane.b32.xlu0 %v367, 87
        %v370 = vpop.permute.xlu0 %369
        %371 = vrot.lane.b32.xlu0 %v368, 87
        %v372 = vpop.permute.xlu0 %371
        %vm373 = vcmask 711680
        %v374 = vsel %vm373, %v370, %v372
        %376 = vst [vmem:[#allocation3 + $0x1c] sm:$0xf] %v374
        %v377 = vld [vmem:[#allocation2] sm:$0xff]
        %379 = vst [vmem:[#allocation1] ss:$2 sm:$0xff] %v377
        %v380 = vld.sshfl [vmem:[#allocation1] sm:$0xff pattern:$0x75316420]
        %v381 = vld.sshfl [vmem:[#allocation1 + $0x8] sm:$0xff pattern:$0x75316420]
        %382 = vrot.lane.b32.xlu0 %v380, 86
        %v383 = vpop.permute.xlu0 %382
        %384 = vrot.lane.b32.xlu0 %v381, 86
        %v385 = vpop.permute.xlu0 %384
        %vm386 = vcmask 703488
        %v387 = vsel %vm386, %v383, %v385
        %389 = vst [vmem:[#allocation3 + $0x20] sm:$0xf] %v387
        %v390 = vld [vmem:[%s2] sm:$0xff]
        %v391 = vld [vmem:[#allocation3] sm:$0xff]
        %v392 = vld [vmem:[#allocation3 + $0x8] sm:$0xff]
        %v393 = vld [vmem:[#allocation3 + $0x10] sm:$0xff]
        %v394 = vld [vmem:[#allocation3 + $0x18] sm:$0xff]
        %v395 = vld [vmem:[#allocation3 + $0x20] sm:$0xf]
        %v396 = vld [vmem:[%s3] sm:$0xff]
        %398 = vset.pattern.permute.xlu0 0
        %399 = vperm.xlu0 %398, %v396
        %v400 = vpop.permute.xlu0 %399
        %vm402 = vcmask 293888
        %v404 = vsel %vm402, %v390, 0
        %vm406 = vcmask 1043456
        %v408 = vsel %vm406, %v395, 0
        %410 = vmatpush.msra.mxu0 0.0
        %411 = vmatpush.msra.mxu0 0.0
        %412 = vmatpush.msra.mxu0 0.0
        %413 = vmatpush.msra.mxu0 0.0
        %414 = vmatpush.msra.mxu0 0.0
        %415 = vmatpush.msra.mxu0 0.0
        %416 = vmatpush.msra.mxu0 0.0
        %417 = vmatpush.msra.mxu0 0.0
        %418 = vmatpush.msra.mxu0 0.0
        %419 = vmatpush.msra.mxu0 0.0
        %420 = vmatpush.msra.mxu0 0.0
        %421 = vmatpush.msra.mxu0 %v408
        %422 = vmatpush.msra.mxu0 %v394
        %423 = vmatpush.msra.mxu0 %v393
        %424 = vmatpush.msra.mxu0 %v392
        %425 = vmatpush.msra.mxu0 %v391
        %426 = vmatmul.f32.gmra.mxu0 %v404
        %v427 = vpop.f32.mrf.mxu0
        %v428 = vadd.f32 %v400, %v427
        %429 = vdwg.mxu0
        %430 = vst [vmem:[%s278] sm:$0xff] %v428
        %s431 = sand.u32 %s146, 1
        %s432 = scalar_lea.sflag [#allocation6], %s431
        %s433 = sand.u32 %s146, 1
        %s434 = smul.addr %s433, 8
        %s435 = scalar_lea.vmem [#allocation9], %s434
        // Predicated region
        $region45: #{tpu_custom_call.1} parent=35 // pred_check
          %p436 = pneg %p156
        $region46: #{tpu_custom_call.1} parent=35 // pred_check_branch
          %438 = sbr.rel (%p436) target = $region48
        $region47: #{tpu_custom_call.1} parent=35 // pred_region
          %440 = vsyncadd %s432, 0
          %s441 = smul.addr %s28, 3
          %s442 = sadd.s32 %s29, %s441
          %s443 = smul.addr %s442, 8
          %s444 = scalar_lea.hbm %s4, %s443
          %s446 = sshll.u32 %s435, 4
          %s447 = int_to_ptr.vmem [resolvable:$true] %s446
          %s448 = sshll.u32 %s444, 4
          %s449 = int_to_ptr.hbm [resolvable:$true] %s448
          %451 = dma.vmem_to_hbm [thread:$0]  %s447, 128, %s449, %s432
        $region48: #{tpu_custom_call.1} parent=35 // pred_fallthru
          _
      $region36: #{tpu_custom_call.1} parent=5 // pred_fallthru
        _
      %p452 = scmp.le.s32.totalorder 2, %s19
      // Predicated region
      $region49: #{tpu_custom_call.1} parent=5 // pred_check
        %p453 = pneg %p452
      $region50: #{tpu_custom_call.1} parent=5 // pred_check_branch
        %455 = sbr.rel (%p453) target = $region52
      $region51: #{tpu_custom_call.1} parent=5 // pred_region
        %s456 = ssub.s32 %s19, 2
        // Predicated region
        $region53: #{tpu_custom_call.1} parent=51 // pred_check
          %p457 = pneg %p162
        $region54: #{tpu_custom_call.1} parent=51 // pred_check_branch
          %459 = sbr.rel (%p457) target = $region56
        $region55: #{tpu_custom_call.1} parent=51 // pred_region
          %s460 = sand.u32 %s147, 1
          %s461 = scalar_lea.sflag [#allocation6], %s460
          %s462 = sand.u32 %s147, 1
          %s463 = smul.addr %s462, 8
          %s464 = scalar_lea.vmem [#allocation9], %s463
          %466 = dma.done %s461, 128
        $region56: #{tpu_custom_call.1} parent=51 // pred_fallthru
          _
      $region52: #{tpu_custom_call.1} parent=5 // pred_fallthru
        _
    $region6: #{tpu_custom_call.1} parent=1 // loop_footer
      %s23 = sadd.s32 1, %s19
    $region7: #{tpu_custom_call.1} parent=1 // loop_footer_branch
      %18 = sbr.rel target = $region3
    $region8: #{tpu_custom_call.1} parent=1 // loop_exit
      _
    %467 = vsyncpa [#allocation5], 1
    %s468 = scalar_lea.sflag [#allocation5], 1
    %469 = vsyncpa %s468, 1
    %470 = vsyncpa [#allocation8], 1
    %s471 = scalar_lea.sflag [#allocation8], 1
    %472 = vsyncpa %s471, 1
    %473 = vsyncpa [#allocation6], 1
    %s474 = scalar_lea.sflag [#allocation6], 1
    %475 = vsyncpa %s474, 1

// kernel: tpu_custom_call.1
$region0: #{tpu_custom_call.1}
  #allocation0 [shape = 'u32[]', space=smem, size = 0x4, offset = 0x4, fixed_abs, tag = 'smem constant byte address 0x4 - core index']
  #allocation1 [shape = 'u32[72,128]{1,0:T(1,128)}', space=vmem, size = 0x9000, scoped, tag = 'internal scratch']
  #allocation2 [shape = 'f32[4,256]{1,0:T(4,128)}', space=vmem, size = 0x1000, scoped, tag = 'scratch operand']
  #allocation3 [shape = 'f32[36,128]{1,0:T(8,128)}', space=vmem, size = 0x5000, scoped, tag = 'scratch operand']
  %s0 = inlined_call_operand.hbm [shape: f32[2,4,520], index: 0, kind: input, shape index: {}]
  %s1 = inlined_call_operand.hbm [shape: f32[2,4,520], index: 1, kind: input, shape index: {}]
  %s2 = inlined_call_operand.vmem [shape: f32[8,36], index: 2, kind: input, shape index: {}]
  %s3 = inlined_call_operand.vmem [shape: f32[8,1], index: 3, kind: input, shape index: {}]
  %s4 = inlined_call_operand.hbm [shape: f32[2,8,384], index: 4, kind: output, shape index: {}]
  %s5 = sld [smem:[#allocation0]]
  $region57: #{tpu_custom_call.1} parent=0
    _
  %s7 = ssub.s32 1, %s5
  %s8 = scalar_select 0, %s7, %s5
  $region1: #{tpu_custom_call.1} parent=0
    #allocation4 [shape = 'u8[4096]{0}', space=vmem, size = 0x1000, scoped, tag = 'input window, operand 0']
    #allocation5 [shape = 's32[2]{0}', space=sflag, size = 0x8, scoped, tag = 'scoped memory for tpu_custom_call.1']
    #allocation6 [shape = 's32[2]{0}', space=sflag, size = 0x8, scoped, tag = 'scoped memory for tpu_custom_call.1']
    #allocation7 [shape = 'u8[4096]{0}', space=vmem, size = 0x1000, scoped, tag = 'input window, operand 1']
    #allocation8 [shape = 's32[2]{0}', space=sflag, size = 0x8, scoped, tag = 'scoped memory for tpu_custom_call.1']
    #allocation9 [shape = 'u8[8192]{0}', space=vmem, size = 0x2000, scoped, tag = 'output window, operand 0']
    %9 = vsyncpa [#allocation5], 0
    %s10 = scalar_lea.sflag [#allocation5], 1
    %11 = vsyncpa %s10, 0
    %12 = vsyncpa [#allocation8], 0
    %s13 = scalar_lea.sflag [#allocation8], 1
    %14 = vsyncpa %s13, 0
    %15 = vsyncpa [#allocation6], 0
    %s16 = scalar_lea.sflag [#allocation6], 1
    %17 = vsyncpa %s16, 0
    loop: start=0, step=1, limit=8
    $region2: #{tpu_custom_call.1} parent=1 // loop_pre_header
      _
    $region3: #{tpu_custom_call.1} parent=1 // loop_header
      %s19 = sphi 0, %s23
      %p20 = scmp.ge.s32.totalorder %s19, 8
      %s26 = sphi 0, %s38
      %s27 = sphi 0, %s34
      %s28 = sphi 0, %s26
      %s29 = sphi 0, %s27
      %s30 = sphi 0, %s28
      %s31 = sphi 0, %s29
      %s43 = sphi 0, %s45
      %s46 = sphi 0, %s43
      %s47 = sphi 0, %s46
      %s63 = sphi 0, %s47
      %s73 = sphi 0, %s75
      %s76 = sphi 0, %s73
      %s77 = sphi 0, %s76
      %s93 = sphi 0, %s77
      %s97 = sphi 0, %s97
      %s99 = sphi 0, %s97
      %s100 = sphi 0, %s99
      %s114 = sphi 0, %s100
      %s118 = sphi 0, %s118
      %s120 = sphi 0, %s118
      %s121 = sphi 0, %s120
      %s135 = sphi 0, %s121
      %s143 = sphi 0, %s145
      %s146 = sphi 0, %s143
      %s147 = sphi 0, %s146
      %s163 = sphi 0, %s147
    $region4: #{tpu_custom_call.1} parent=1 // loop_header_branch
      %22 = sbr.rel (%p20) target = $region8
    $region5: #{tpu_custom_call.1} parent=1 // loop_body
      %s24 = ssub.s32 %s19, 1
      %s25 = ssub.s32 %s19, 2
      %s32 = sadd.s32 1, %s27
      %p33 = scmp.ge.s32.totalorder %s32, 3
      %s34 = scalar_select %p33, 0, %s32
      %s35 = sadd.s32 1, %s26
      %s36 = scalar_select %p33, %s35, %s26
      %p37 = scmp.ge.s32.totalorder %s36, 2
      %s38 = scalar_select %p37, 0, %s36
      %s39 = ssub.s32 %s26, %s38
      %s40 = ssub.s32 %s27, %s34
      %s41 = sor.u32 %s39, %s40
      %p42 = scmp.eq.s32.totalorder %s41, 0
      %s44 = sadd.s32 %s43, 1
      %s45 = scalar_select %p42, %s43, %s44
      %p48 = pneg %p42
      %p49 = scmp.eq.s32.totalorder %s19, 5
      %p50 = por %p48, %p49
      %p51 = scmp.ne.s32.totalorder %s43, %s46
      %p52 = scmp.eq.s32.totalorder %s19, 0
      %p53 = por %p51, %p52
      %p54 = scmp.ne.s32.totalorder %s43, %s46
      %p55 = scmp.eq.s32.totalorder %s24, 5
      %p56 = por %p54, %p55
      %p57 = scmp.ne.s32.totalorder %s46, %s47
      %p58 = scmp.eq.s32.totalorder %s24, 0
      %p59 = por %p57, %p58
      %p60 = scmp.ne.s32.totalorder %s46, %s47
      %p61 = scmp.eq.s32.totalorder %s25, 5
      %p62 = por %p60, %p61
      %p64 = scmp.ne.s32.totalorder %s47, %s63
      %p65 = scmp.eq.s32.totalorder %s25, 0
      %p66 = por %p64, %p65
      %s67 = sadd.s32 %s27, 1
      %s68 = sadd.s32 %s34, 1
      %s69 = ssub.s32 %s26, %s38
      %s70 = ssub.s32 %s67, %s68
      %s71 = sor.u32 %s69, %s70
      %p72 = scmp.eq.s32.totalorder %s71, 0
      %s74 = sadd.s32 %s73, 1
      %s75 = scalar_select %p72, %s73, %s74
      %p78 = pneg %p72
      %p79 = scmp.eq.s32.totalorder %s19, 5
      %p80 = por %p78, %p79
      %p81 = scmp.ne.s32.totalorder %s73, %s76
      %p82 = scmp.eq.s32.totalorder %s19, 0
      %p83 = por %p81, %p82
      %p84 = scmp.ne.s32.totalorder %s73, %s76
      %p85 = scmp.eq.s32.totalorder %s24, 5
      %p86 = por %p84, %p85
      %p87 = scmp.ne.s32.totalorder %s76, %s77
      %p88 = scmp.eq.s32.totalorder %s24, 0
      %p89 = por %p87, %p88
      %p90 = scmp.ne.s32.totalorder %s76, %s77
      %p91 = scmp.eq.s32.totalorder %s25, 5
      %p92 = por %p90, %p91
      %p94 = scmp.ne.s32.totalorder %s77, %s93
      %p95 = scmp.eq.s32.totalorder %s25, 0
      %p96 = por %p94, %p95
      %s98 = sadd.s32 %s97, 1
      %p101 = scmp.eq.s32.totalorder %s19, 5
      %p102 = scmp.ne.s32.totalorder %s97, %s99
      %p103 = scmp.eq.s32.totalorder %s19, 0
      %p104 = por %p102, %p103
      %p105 = scmp.ne.s32.totalorder %s97, %s99
      %p106 = scmp.eq.s32.totalorder %s24, 5
      %p107 = por %p105, %p106
      %p108 = scmp.ne.s32.totalorder %s99, %s100
      %p109 = scmp.eq.s32.totalorder %s24, 0
      %p110 = por %p108, %p109
      %p111 = scmp.ne.s32.totalorder %s99, %s100
      %p112 = scmp.eq.s32.totalorder %s25, 5
      %p113 = por %p111, %p112
      %p115 = scmp.ne.s32.totalorder %s100, %s114
      %p116 = scmp.eq.s32.totalorder %s25, 0
      %p117 = por %p115, %p116
      %s119 = sadd.s32 %s118, 1
      %p122 = scmp.eq.s32.totalorder %s19, 5
      %p123 = scmp.ne.s32.totalorder %s118, %s120
      %p124 = scmp.eq.s32.totalorder %s19, 0
      %p125 = por %p123, %p124
      %p126 = scmp.ne.s32.totalorder %s118, %s120
      %p127 = scmp.eq.s32.totalorder %s24, 5
      %p128 = por %p126, %p127
      %p129 = scmp.ne.s32.totalorder %s120, %s121
      %p130 = scmp.eq.s32.totalorder %s24, 0
      %p131 = por %p129, %p130
      %p132 = scmp.ne.s32.totalorder %s120, %s121
      %p133 = scmp.eq.s32.totalorder %s25, 5
      %p134 = por %p132, %p133
      %p136 = scmp.ne.s32.totalorder %s121, %s135
      %p137 = scmp.eq.s32.totalorder %s25, 0
      %p138 = por %p136, %p137
      %s139 = ssub.s32 %s26, %s38
      %s140 = ssub.s32 %s27, %s34
      %s141 = sor.u32 %s139, %s140
      %p142 = scmp.eq.s32.totalorder %s141, 0
      %s144 = sadd.s32 %s143, 1
      %s145 = scalar_select %p142, %s143, %s144
      %p148 = pneg %p142
      %p149 = scmp.eq.s32.totalorder %s19, 5
      %p150 = por %p148, %p149
      %p151 = scmp.ne.s32.totalorder %s143, %s146
      %p152 = scmp.eq.s32.totalorder %s19, 0
      %p153 = por %p151, %p152
      %p154 = scmp.ne.s32.totalorder %s143, %s146
      %p155 = scmp.eq.s32.totalorder %s24, 5
      %p156 = por %p154, %p155
      %p157 = scmp.ne.s32.totalorder %s146, %s147
      %p158 = scmp.eq.s32.totalorder %s24, 0
      %p159 = por %p157, %p158
      %p160 = scmp.ne.s32.totalorder %s146, %s147
      %p161 = scmp.eq.s32.totalorder %s25, 5
      %p162 = por %p160, %p161
      %p164 = scmp.ne.s32.totalorder %s147, %s163
      %p165 = scmp.eq.s32.totalorder %s25, 0
      %p166 = por %p164, %p165
      %p167 = scmp.le.s32.totalorder 1, %s19
      %p168 = scmp.lt.s32.totalorder %s19, 7
      %p169 = pnand %p167, %p168
      %p170 = pneg %p169
      // Predicated region
      $region9: #{tpu_custom_call.1} parent=5 // pred_check
        _
      $region10: #{tpu_custom_call.1} parent=5 // pred_check_branch
        %172 = sbr.rel (%p169) target = $region12
      $region11: #{tpu_custom_call.1} parent=5 // pred_region
        %s173 = ssub.s32 %s19, 1
        // Predicated region
        $region13: #{tpu_custom_call.1} parent=11 // pred_check
          %p174 = pneg %p110
        $region14: #{tpu_custom_call.1} parent=11 // pred_check_branch
          %176 = sbr.rel (%p174) target = $region16
        $region15: #{tpu_custom_call.1} parent=11 // pred_region
          _
        $region16: #{tpu_custom_call.1} parent=11 // pred_fallthru
          _
        // Predicated region
        $region17: #{tpu_custom_call.1} parent=11 // pred_check
          %p177 = pneg %p131
        $region18: #{tpu_custom_call.1} parent=11 // pred_check_branch
          %179 = sbr.rel (%p177) target = $region20
        $region19: #{tpu_custom_call.1} parent=11 // pred_region
          _
        $region20: #{tpu_custom_call.1} parent=11 // pred_fallthru
          _
      $region12: #{tpu_custom_call.1} parent=5 // pred_fallthru
        _
      %p180 = scmp.lt.s32.totalorder %s19, 6
      // Predicated region
      $region21: #{tpu_custom_call.1} parent=5 // pred_check
        %p181 = pneg %p180
      $region22: #{tpu_custom_call.1} parent=5 // pred_check_branch
        %183 = sbr.rel (%p181) target = $region24
      $region23: #{tpu_custom_call.1} parent=5 // pred_region
        // Predicated region
        $region25: #{tpu_custom_call.1} parent=23 // pred_check
          %p184 = pneg %p53
        $region26: #{tpu_custom_call.1} parent=23 // pred_check_branch
          %186 = sbr.rel (%p184) target = $region28
        $region27: #{tpu_custom_call.1} parent=23 // pred_region
          %s187 = sand.u32 %s43, 1
          %s188 = scalar_lea.sflag [#allocation5], %s187
          %s189 = sand.u32 %s43, 1
          %s190 = smul.addr %s189, 4
          %s191 = scalar_lea.vmem [#allocation4], %s190
          %193 = vsyncadd %s188, 0
          %s194 = smul.addr %s26, 5
          %s195 = sadd.s32 %s27, %s194
          %s196 = smul.addr %s195, 4
          %s197 = scalar_lea.hbm %s0, %s196
          %s199 = sshll.u32 %s197, 4
          %s200 = int_to_ptr.hbm [resolvable:$true] %s199
          %s201 = sshll.u32 %s191, 4
          %s202 = int_to_ptr.vmem [resolvable:$true] %s201
          %204 = dma.hbm_to_vmem [thread:$0]  %s200, 64, %s202, %s188
        $region28: #{tpu_custom_call.1} parent=23 // pred_fallthru
          _
        // Predicated region
        $region29: #{tpu_custom_call.1} parent=23 // pred_check
          %p205 = pneg %p83
        $region30: #{tpu_custom_call.1} parent=23 // pred_check_branch
          %207 = sbr.rel (%p205) target = $region32
        $region31: #{tpu_custom_call.1} parent=23 // pred_region
          %s208 = sand.u32 %s73, 1
          %s209 = scalar_lea.sflag [#allocation8], %s208
          %s210 = sand.u32 %s73, 1
          %s211 = smul.addr %s210, 4
          %s212 = scalar_lea.vmem [#allocation7], %s211
          %s213 = sadd.s32 %s27, 1
          %215 = vsyncadd %s209, 0
          %s216 = smul.addr %s26, 5
          %s217 = sadd.s32 %s213, %s216
          %s218 = smul.addr %s217, 4
          %s219 = scalar_lea.hbm %s1, %s218
          %s221 = sshll.u32 %s219, 4
          %s222 = int_to_ptr.hbm [resolvable:$true] %s221
          %s223 = sshll.u32 %s212, 4
          %s224 = int_to_ptr.vmem [resolvable:$true] %s223
          %226 = dma.hbm_to_vmem [thread:$0]  %s222, 64, %s224, %s209
        $region32: #{tpu_custom_call.1} parent=23 // pred_fallthru
          _
      $region24: #{tpu_custom_call.1} parent=5 // pred_fallthru
        _
      %p227 = scmp.le.s32.totalorder 1, %s19
      %p228 = scmp.lt.s32.totalorder %s19, 7
      %p229 = pnand %p227, %p228
      %p230 = pneg %p229
      // Predicated region
      $region33: #{tpu_custom_call.1} parent=5 // pred_check
        _
      $region34: #{tpu_custom_call.1} parent=5 // pred_check_branch
        %232 = sbr.rel (%p229) target = $region36
      $region35: #{tpu_custom_call.1} parent=5 // pred_region
        %s233 = ssub.s32 %s19, 1
        %s234 = sand.u32 %s46, 1
        %s235 = scalar_lea.sflag [#allocation5], %s234
        %s236 = sand.u32 %s46, 1
        %s237 = smul.addr %s236, 4
        %s238 = scalar_lea.vmem [#allocation4], %s237
        // Predicated region
        $region37: #{tpu_custom_call.1} parent=35 // pred_check
          %p239 = pneg %p59
        $region38: #{tpu_custom_call.1} parent=35 // pred_check_branch
          %241 = sbr.rel (%p239) target = $region40
        $region39: #{tpu_custom_call.1} parent=35 // pred_region
          %243 = dma.done %s235, 64
        $region40: #{tpu_custom_call.1} parent=35 // pred_fallthru
          _
        %s244 = sand.u32 %s76, 1
        %s245 = scalar_lea.sflag [#allocation8], %s244
        %s246 = sand.u32 %s76, 1
        %s247 = smul.addr %s246, 4
        %s248 = scalar_lea.vmem [#allocation7], %s247
        // Predicated region
        $region41: #{tpu_custom_call.1} parent=35 // pred_check
          %p249 = pneg %p89
        $region42: #{tpu_custom_call.1} parent=35 // pred_check_branch
          %251 = sbr.rel (%p249) target = $region44
        $region43: #{tpu_custom_call.1} parent=35 // pred_region
          %253 = dma.done %s245, 64
        $region44: #{tpu_custom_call.1} parent=35 // pred_fallthru
          _
        %s254 = sand.u32 %s46, 1
        %s255 = scalar_lea.sflag [#allocation5], %s254
        %s256 = sand.u32 %s46, 1
        %s257 = smul.addr %s256, 4
        %s258 = scalar_lea.vmem [#allocation4], %s257
        %p259 = pneg %p59
        %p260 = pneg %p56
        %s261 = sand.u32 %s76, 1
        %s262 = scalar_lea.sflag [#allocation8], %s261
        %s263 = sand.u32 %s76, 1
        %s264 = smul.addr %s263, 4
        %s265 = scalar_lea.vmem [#allocation7], %s264
        %p266 = pneg %p89
        %p267 = pneg %p86
        %p268 = pneg %p110
        %p269 = pneg %p107
        %p270 = pneg %p131
        %p271 = pneg %p128
        %p272 = pneg %p159
        %p273 = pneg %p156
        %s274 = sand.u32 %s146, 1
        %s275 = scalar_lea.sflag [#allocation6], %s274
        %s276 = sand.u32 %s146, 1
        %s277 = smul.addr %s276, 8
        %s278 = scalar_lea.vmem [#allocation9], %s277
        %s279 = sadd.s32 %s29, 1
        %v280 = vld [vmem:[%s238] sm:$0xf]
        %281 = vst [vmem:[#allocation2] sm:$0xf] %v280
        %v282 = vld [vmem:[%s248] sm:$0xf]
        %283 = vst [vmem:[#allocation2 + $0x4] sm:$0xf] %v282
        %v284 = vld [vmem:[#allocation2] sm:$0xf]
        %285 = vst [vmem:[#allocation3] sm:$0xf] %v284
        %v286 = vld [vmem:[#allocation2] sm:$0xff]
        %288 = vst [vmem:[#allocation1] ss:$2 sm:$0xff] %v286
        %v289 = vld.sshfl [vmem:[#allocation1] sm:$0xff pattern:$0x75316420]
        %v290 = vld.sshfl [vmem:[#allocation1 + $0x8] sm:$0xff pattern:$0x75316420]
        %291 = vrot.lane.b32.xlu0 %v289, 127
        %v292 = vpop.permute.xlu0 %291
        %293 = vrot.lane.b32.xlu0 %v290, 127
        %v294 = vpop.permute.xlu0 %293
        %vm295 = vcmask 1039360
        %v296 = vsel %vm295, %v292, %v294
        %298 = vst [vmem:[#allocation3 + $0x4] sm:$0xf] %v296
        %v299 = vld [vmem:[#allocation2] sm:$0xff]
        %301 = vst [vmem:[#allocation1] ss:$2 sm:$0xff] %v299
        %v302 = vld.sshfl [vmem:[#allocation1] sm:$0xff pattern:$0x75316420]
        %v303 = vld.sshfl [vmem:[#allocation1 + $0x8] sm:$0xff pattern:$0x75316420]
        %304 = vrot.lane.b32.xlu0 %v302, 126
        %v305 = vpop.permute.xlu0 %304
        %306 = vrot.lane.b32.xlu0 %v303, 126
        %v307 = vpop.permute.xlu0 %306
        %vm308 = vcmask 1031168
        %v309 = vsel %vm308, %v305, %v307
        %311 = vst [vmem:[#allocation3 + $0x8] sm:$0xf] %v309
        %v312 = vld [vmem:[#allocation2] sm:$0xff]
        %314 = vst [vmem:[#allocation1] ss:$2 sm:$0xff] %v312
        %v315 = vld.sshfl [vmem:[#allocation1] sm:$0xff pattern:$0x75316420]
        %v316 = vld.sshfl [vmem:[#allocation1 + $0x8] sm:$0xff pattern:$0x75316420]
        %317 = vrot.lane.b32.xlu0 %v315, 108
        %v318 = vpop.permute.xlu0 %317
        %319 = vrot.lane.b32.xlu0 %v316, 108
        %v320 = vpop.permute.xlu0 %319
        %vm321 = vcmask 883712
        %v322 = vsel %vm321, %v318, %v320
        %324 = vst [vmem:[#allocation3 + $0xc] sm:$0xf] %v322
        %v325 = vld [vmem:[#allocation2] sm:$0xff]
        %327 = vst [vmem:[#allocation1] ss:$2 sm:$0xff] %v325
        %v328 = vld.sshfl [vmem:[#allocation1] sm:$0xff pattern:$0x75316420]
        %v329 = vld.sshfl [vmem:[#allocation1 + $0x8] sm:$0xff pattern:$0x75316420]
        %330 = vrot.lane.b32.xlu0 %v328, 107
        %v331 = vpop.permute.xlu0 %330
        %332 = vrot.lane.b32.xlu0 %v329, 107
        %v333 = vpop.permute.xlu0 %332
        %vm334 = vcmask 875520
        %v335 = vsel %vm334, %v331, %v333
        %337 = vst [vmem:[#allocation3 + $0x10] sm:$0xf] %v335
        %v338 = vld [vmem:[#allocation2] sm:$0xff]
        %340 = vst [vmem:[#allocation1] ss:$2 sm:$0xff] %v338
        %v341 = vld.sshfl [vmem:[#allocation1] sm:$0xff pattern:$0x75316420]
        %v342 = vld.sshfl [vmem:[#allocation1 + $0x8] sm:$0xff pattern:$0x75316420]
        %343 = vrot.lane.b32.xlu0 %v341, 106
        %v344 = vpop.permute.xlu0 %343
        %345 = vrot.lane.b32.xlu0 %v342, 106
        %v346 = vpop.permute.xlu0 %345
        %vm347 = vcmask 867328
        %v348 = vsel %vm347, %v344, %v346
        %350 = vst [vmem:[#allocation3 + $0x14] sm:$0xf] %v348
        %v351 = vld [vmem:[#allocation2] sm:$0xff]
        %353 = vst [vmem:[#allocation1] ss:$2 sm:$0xff] %v351
        %v354 = vld.sshfl [vmem:[#allocation1] sm:$0xff pattern:$0x75316420]
        %v355 = vld.sshfl [vmem:[#allocation1 + $0x8] sm:$0xff pattern:$0x75316420]
        %356 = vrot.lane.b32.xlu0 %v354, 88
        %v357 = vpop.permute.xlu0 %356
        %358 = vrot.lane.b32.xlu0 %v355, 88
        %v359 = vpop.permute.xlu0 %358
        %vm360 = vcmask 719872
        %v361 = vsel %vm360, %v357, %v359
        %363 = vst [vmem:[#allocation3 + $0x18] sm:$0xf] %v361
        %v364 = vld [vmem:[#allocation2] sm:$0xff]
        %366 = vst [vmem:[#allocation1] ss:$2 sm:$0xff] %v364
        %v367 = vld.sshfl [vmem:[#allocation1] sm:$0xff pattern:$0x75316420]
        %v368 = vld.sshfl [vmem:[#allocation1 + $0x8] sm:$0xff pattern:$0x75316420]
        %369 = vrot.lane.b32.xlu0 %v367, 87
        %v370 = vpop.permute.xlu0 %369
        %371 = vrot.lane.b32.xlu0 %v368, 87
        %v372 = vpop.permute.xlu0 %371
        %vm373 = vcmask 711680
        %v374 = vsel %vm373, %v370, %v372
        %376 = vst [vmem:[#allocation3 + $0x1c] sm:$0xf] %v374
        %v377 = vld [vmem:[#allocation2] sm:$0xff]
        %379 = vst [vmem:[#allocation1] ss:$2 sm:$0xff] %v377
        %v380 = vld.sshfl [vmem:[#allocation1] sm:$0xff pattern:$0x75316420]
        %v381 = vld.sshfl [vmem:[#allocation1 + $0x8] sm:$0xff pattern:$0x75316420]
        %382 = vrot.lane.b32.xlu0 %v380, 86
        %v383 = vpop.permute.xlu0 %382
        %384 = vrot.lane.b32.xlu0 %v381, 86
        %v385 = vpop.permute.xlu0 %384
        %vm386 = vcmask 703488
        %v387 = vsel %vm386, %v383, %v385
        %389 = vst [vmem:[#allocation3 + $0x20] sm:$0xf] %v387
        %v390 = vld [vmem:[%s2] sm:$0xff]
        %v391 = vld [vmem:[#allocation3] sm:$0xff]
        %v392 = vld [vmem:[#allocation3 + $0x8] sm:$0xff]
        %v393 = vld [vmem:[#allocation3 + $0x10] sm:$0xff]
        %v394 = vld [vmem:[#allocation3 + $0x18] sm:$0xff]
        %v395 = vld [vmem:[#allocation3 + $0x20] sm:$0xf]
        %v396 = vld [vmem:[%s3] sm:$0xff]
        %398 = vset.pattern.permute.xlu0 0
        %399 = vperm.xlu0 %398, %v396
        %v400 = vpop.permute.xlu0 %399
        %vm402 = vcmask 293888
        %v404 = vsel %vm402, %v390, 0
        %vm406 = vcmask 1043456
        %v408 = vsel %vm406, %v395, 0
        %410 = vmatpush.msra.mxu0 0.0
        %411 = vmatpush.msra.mxu0 0.0
        %412 = vmatpush.msra.mxu0 0.0
        %413 = vmatpush.msra.mxu0 0.0
        %414 = vmatpush.msra.mxu0 0.0
        %415 = vmatpush.msra.mxu0 0.0
        %416 = vmatpush.msra.mxu0 0.0
        %417 = vmatpush.msra.mxu0 0.0
        %418 = vmatpush.msra.mxu0 0.0
        %419 = vmatpush.msra.mxu0 0.0
        %420 = vmatpush.msra.mxu0 0.0
        %421 = vmatpush.msra.mxu0 %v408
        %422 = vmatpush.msra.mxu0 %v394
        %423 = vmatpush.msra.mxu0 %v393
        %424 = vmatpush.msra.mxu0 %v392
        %425 = vmatpush.msra.mxu0 %v391
        %426 = vmatmul.f32.gmra.mxu0 %v404
        %v427 = vpop.f32.mrf.mxu0
        %v428 = vadd.f32 %v400, %v427
        %429 = vdwg.mxu0
        %430 = vst [vmem:[%s278] sm:$0xff] %v428
        %s431 = sand.u32 %s146, 1
        %s432 = scalar_lea.sflag [#allocation6], %s431
        %s433 = sand.u32 %s146, 1
        %s434 = smul.addr %s433, 8
        %s435 = scalar_lea.vmem [#allocation9], %s434
        // Predicated region
        $region45: #{tpu_custom_call.1} parent=35 // pred_check
          %p436 = pneg %p156
        $region46: #{tpu_custom_call.1} parent=35 // pred_check_branch
          %438 = sbr.rel (%p436) target = $region48
        $region47: #{tpu_custom_call.1} parent=35 // pred_region
          %440 = vsyncadd %s432, 0
          %s441 = smul.addr %s28, 3
          %s442 = sadd.s32 %s29, %s441
          %s443 = smul.addr %s442, 8
          %s444 = scalar_lea.hbm %s4, %s443
          %s446 = sshll.u32 %s435, 4
          %s447 = int_to_ptr.vmem [resolvable:$true] %s446
          %s448 = sshll.u32 %s444, 4
          %s449 = int_to_ptr.hbm [resolvable:$true] %s448
          %451 = dma.vmem_to_hbm [thread:$0]  %s447, 128, %s449, %s432
        $region48: #{tpu_custom_call.1} parent=35 // pred_fallthru
          _
      $region36: #{tpu_custom_call.1} parent=5 // pred_fallthru
        _
      %p452 = scmp.le.s32.totalorder 2, %s19
      // Predicated region
      $region49: #{tpu_custom_call.1} parent=5 // pred_check
        %p453 = pneg %p452
      $region50: #{tpu_custom_call.1} parent=5 // pred_check_branch
        %455 = sbr.rel (%p453) target = $region52
      $region51: #{tpu_custom_call.1} parent=5 // pred_region
        %s456 = ssub.s32 %s19, 2
        // Predicated region
        $region53: #{tpu_custom_call.1} parent=51 // pred_check
          %p457 = pneg %p162
        $region54: #{tpu_custom_call.1} parent=51 // pred_check_branch
          %459 = sbr.rel (%p457) target = $region56
        $region55: #{tpu_custom_call.1} parent=51 // pred_region
          %s460 = sand.u32 %s147, 1
          %s461 = scalar_lea.sflag [#allocation6], %s460
          %s462 = sand.u32 %s147, 1
          %s463 = smul.addr %s462, 8
          %s464 = scalar_lea.vmem [#allocation9], %s463
          %466 = dma.done %s461, 128
        $region56: #{tpu_custom_call.1} parent=51 // pred_fallthru
          _
      $region52: #{tpu_custom_call.1} parent=5 // pred_fallthru
        _
    $region6: #{tpu_custom_call.1} parent=1 // loop_footer
      %s23 = sadd.s32 1, %s19
    $region7: #{tpu_custom_call.1} parent=1 // loop_footer_branch
      %18 = sbr.rel target = $region3
    $region8: #{tpu_custom_call.1} parent=1 // loop_exit
      _
    %467 = vsyncpa [#allocation5], 1
    %s468 = scalar_lea.sflag [#allocation5], 1
    %469 = vsyncpa %s468, 1
    %470 = vsyncpa [#allocation8], 1
    %s471 = scalar_lea.sflag [#allocation8], 1
    %472 = vsyncpa %s471, 1
    %473 = vsyncpa [#allocation6], 1
    %s474 = scalar_lea.sflag [#allocation6], 1
    %475 = vsyncpa %s474, 1

</llo_original>
